<compile_context>
chip_gen: v7x
topology: tpu7x:2x2x1
jax: 0.10.0
libtpu: 0.0.40
codegen_flags: <defaults>
</compile_context>

<pallas_src>
import functools

import numpy as np

import jax
import jax.numpy as jnp
from jax.experimental import pallas as pl
from jax.experimental.pallas import tpu as pltpu

BN_EPS = 1e-5  # nn.BatchNorm1d default
LANE = 128     # TPU lane width


def _round_up(v, m):
    return (v + m - 1) // m * m


def _vmem_limit_bytes():
    """~75% of physical VMEM (96 MiB on v5e/v6e, 48 MiB on v7x), capped at 100 MiB."""
    try:
        cap = pltpu.get_tpu_info().vmem_capacity_bytes
    except Exception:
        cap = 64 * 1024 * 1024  # conservative (v7x-sized) fallback
    return min(int(cap * 3 // 4), 100 * 1024 * 1024)


def _bn_relu(y, gamma, beta):
    """Training-mode BatchNorm1d + ReLU, one-pass statistics, f32 math.

    y: (N, D) f32, gamma/beta: (1, D) f32.
    """
    inv_n = 1.0 / y.shape[0]
    mean = jnp.sum(y, axis=0, keepdims=True) * inv_n
    ms = jnp.sum(y * y, axis=0, keepdims=True) * inv_n
    var = jnp.maximum(ms - mean * mean, 0.0)          # clamp tiny negative rounding
    scale = jax.lax.rsqrt(var + BN_EPS) * gamma       # gamma folded into inv-std
    shift = beta - mean * scale                       # beta + centering folded
    return jnp.maximum(y * scale + shift, 0.0)


def _single_step_kernel(x_ref, w_ref, gb_ref, o_ref, *, n_layers):
    """Whole layer stack in one grid step; unrolled in-kernel layer loop.

    x_ref : (N, D)            padded input (f32)
    w_ref : (L, D, D)         full weight stack (f32 or bf16)
    gb_ref: (L, 2, D)         gamma (row 0) / beta (row 1), f32
    o_ref : (N, D)            output (f32)
    """
    act = x_ref[...]
    for i in range(n_layers):
        w = w_ref[i]
        a = act.astype(w.dtype)  # no-op in the f32 path
        y = jnp.dot(a, w, preferred_element_type=jnp.float32)
        act = _bn_relu(y, gb_ref[i, 0:1, :], gb_ref[i, 1:2, :])
    o_ref[...] = act


def _streamed_kernel(x_ref, w_ref, gb_ref, o_ref):
    """One grid step = one layer; running activation lives in the resident o_ref.

    x_ref : (N, D)        padded input, constant block index -> VMEM-resident
    w_ref : (1, D, D)     this layer's weight (f32 or bf16), streamed per step
    gb_ref: (1, 2, D)     this layer's gamma/beta, streamed per step
    o_ref : (N, D)        resident output block = running activation
    """
    layer = pl.program_id(0)

    @pl.when(layer == 0)
    def _():
        o_ref[...] = x_ref[...]

    act = o_ref[...]
    w = w_ref[0]
    a = act.astype(w.dtype)  # no-op in the f32 path
    y = jnp.dot(a, w, preferred_element_type=jnp.float32)
    o_ref[...] = _bn_relu(y, gb_ref[0, 0:1, :], gb_ref[0, 1:2, :])


def prepare_linear_block_2d(params, input_dim, *, operand_dtype=jnp.float32):
    """One-time parameter preparation (hoisted out of the forward pass).

    params: list of (w_t, b, gamma, beta), w_t shape (d_in, d_out) (already
    transposed from PyTorch's (d_out, d_in)). The linear bias b is accepted for
    interface fidelity but intentionally unused (cancels under training BN).
    """
    n_layers = len(params)
    dims = [input_dim] + [w_t.shape[1] for (w_t, _, _, _) in params]
    d_pad = _round_up(max(dims), LANE)   # one lane-dense width for every layer
    out_dim = dims[-1]

    w_np = np.zeros((n_layers, d_pad, d_pad), np.float32)
    gb_np = np.zeros((n_layers, 2, d_pad), np.float32)
    for i, (w_t, _b, gamma, beta) in enumerate(params):
        d_in, d_out = w_t.shape
        w_np[i, :d_in, :d_out] = np.asarray(w_t, np.float32)
        gb_np[i, 0, :d_out] = np.asarray(gamma, np.float32)
        gb_np[i, 1, :d_out] = np.asarray(beta, np.float32)

    # Narrow weights are stored narrow in HBM: halves weight DMA bytes and the
    # double-buffered weight VMEM footprint in the streamed path.
    w_stack = jnp.asarray(w_np).astype(operand_dtype)
    gb_stack = jnp.asarray(gb_np)  # BN math stays f32

    return {
        "w": w_stack,
        "gb": gb_stack,
        "d_pad": d_pad,
        "input_dim": input_dim,
        "out_dim": out_dim,
    }


def linear_block_2d_forward(x, prepared, *, force_streamed=False):
    """Fused forward pass: one pallas_call for the whole layer stack."""
    w = prepared["w"]
    gb = prepared["gb"]
    d_pad = prepared["d_pad"]
    input_dim = prepared["input_dim"]
    out_dim = prepared["out_dim"]
    n_layers = w.shape[0]

    n = x.shape[0]
    x_pad = jnp.pad(x.astype(jnp.float32), ((0, 0), (0, d_pad - input_dim)))

    vmem_limit = _vmem_limit_bytes()

    # Whole-stack-in-VMEM budget check for the single-step path.
    w_bytes = n_layers * d_pad * d_pad * w.dtype.itemsize
    act_bytes = 2 * n * d_pad * 4
    gb_bytes = n_layers * 2 * d_pad * 4
    single_step = (not force_streamed) and (w_bytes + act_bytes + gb_bytes) <= (16 << 20)

    if single_step:
        out_pad = pl.pallas_call(
            functools.partial(_single_step_kernel, n_layers=n_layers),
            out_shape=jax.ShapeDtypeStruct((n, d_pad), jnp.float32),
            grid=(1,),
            in_specs=[
                pl.BlockSpec((n, d_pad), lambda i: (0, 0)),
                pl.BlockSpec((n_layers, d_pad, d_pad), lambda i: (0, 0, 0)),
                pl.BlockSpec((n_layers, 2, d_pad), lambda i: (0, 0, 0)),
            ],
            out_specs=pl.BlockSpec((n, d_pad), lambda i: (0, 0)),
            compiler_params=pltpu.CompilerParams(
                dimension_semantics=("arbitrary",),
                vmem_limit_bytes=vmem_limit,
            ),
        )(x_pad, w, gb)
    else:
        out_pad = pl.pallas_call(
            _streamed_kernel,
            out_shape=jax.ShapeDtypeStruct((n, d_pad), jnp.float32),
            grid=(n_layers,),
            in_specs=[
                # Input: same block every step -> VMEM-resident.
                pl.BlockSpec((n, d_pad), lambda l: (0, 0)),
                # Per-layer weight / (gamma,beta): streamed, double-buffered.
                pl.BlockSpec((1, d_pad, d_pad), lambda l: (l, 0, 0)),
                pl.BlockSpec((1, 2, d_pad), lambda l: (l, 0, 0)),
            ],
            # Constant output block index -> resident buffer used as the running
            # activation (no extra scratch, no final copy).
            out_specs=pl.BlockSpec((n, d_pad), lambda l: (0, 0)),
            compiler_params=pltpu.CompilerParams(
                # Sequential dependence through the resident output block.
                dimension_semantics=("arbitrary",),
                vmem_limit_bytes=vmem_limit,
            ),
        )(x_pad, w, gb)

    return out_pad[:, :out_dim]


def init_linear_block_2d_params(key, input_dim, hidden_dim, output_dim, layers):
    """Deterministic parameter init mirroring the shapes in LinearBlock2D.__init__."""
    if layers == 1:
        dims = [(input_dim, hidden_dim)]
    else:
        dims = []
        for i in range(layers):
            if i == 0:
                dims.append((input_dim, hidden_dim))
            elif i == layers - 1:
                dims.append((hidden_dim, output_dim))
            else:
                dims.append((hidden_dim, hidden_dim))

    params = []
    for (d_in, d_out) in dims:
        key, k_w, k_b, k_g, k_be = jax.random.split(key, 5)
        w_t = (jax.random.normal(k_w, (d_in, d_out), jnp.float32)
               * (1.0 / jnp.sqrt(d_in)))
        b = jax.random.normal(k_b, (d_out,), jnp.float32) * 0.1
        gamma = 1.0 + 0.1 * jax.random.normal(k_g, (d_out,), jnp.float32)
        beta = 0.1 * jax.random.normal(k_be, (d_out,), jnp.float32)
        params.append((w_t, b, gamma, beta))
    return params


def _reference_forward(x, params):
    """Pure-JAX reference matching the PyTorch module's training-mode forward
    (including the linear bias, which the kernel provably drops)."""
    for (w_t, b, gamma, beta) in params:
        y = x @ w_t + b[None, :]
        mean = jnp.mean(y, axis=0, keepdims=True)
        var = jnp.mean((y - mean) ** 2, axis=0, keepdims=True)
        y = (y - mean) * jax.lax.rsqrt(var + BN_EPS)
        y = y * gamma[None, :] + beta[None, :]
        x = jnp.maximum(y, 0.0)
    return x


if __name__ == "__main__":
    key = jax.random.PRNGKey(0)
    k_x, k_p, k_p1 = jax.random.split(key, 3)

    batch = 8
    input_dim = 16
    hidden_dim = 32
    output_dim = 16
    layers = 3

    x = jax.random.normal(k_x, (batch, input_dim), jnp.float32)
    params = init_linear_block_2d_params(k_p, input_dim, hidden_dim,
                                         output_dim, layers)
    ref = _reference_forward(x, params)

    # f32, single-step (whole stack in VMEM) path.
    prepared = prepare_linear_block_2d(params, input_dim)
    out = jax.block_until_ready(linear_block_2d_forward(x, prepared))
    assert out.shape == (batch, output_dim)
    assert jnp.allclose(out, ref, atol=5e-4, rtol=5e-4)

    # f32, streamed (one layer per grid step) path.
    out_s = jax.block_until_ready(
        linear_block_2d_forward(x, prepared, force_streamed=True))
    assert out_s.shape == (batch, output_dim)
    assert jnp.allclose(out_s, ref, atol=5e-4, rtol=5e-4)

    # layers == 1 branch of the module.
    params1 = init_linear_block_2d_params(k_p1, input_dim, hidden_dim,
                                          output_dim, 1)
    prepared1 = prepare_linear_block_2d(params1, input_dim)
    out1 = jax.block_until_ready(linear_block_2d_forward(x, prepared1))
    ref1 = _reference_forward(x, params1)
    assert out1.shape == (batch, hidden_dim)
    assert jnp.allclose(out1, ref1, atol=5e-4, rtol=5e-4)

    # bf16 weights-in-HBM path (v6e/v7x optimization): sanity check only.
    prepared_bf16 = prepare_linear_block_2d(params, input_dim,
                                            operand_dtype=jnp.bfloat16)
    out_bf16 = jax.block_until_ready(linear_block_2d_forward(x, prepared_bf16))
    assert out_bf16.shape == (batch, output_dim)
    assert bool(jnp.all(jnp.isfinite(out_bf16)))
    assert float(jnp.max(jnp.abs(out_bf16 - ref))) < 0.3
    out_bf16_s = jax.block_until_ready(
        linear_block_2d_forward(x, prepared_bf16, force_streamed=True))
    assert float(jnp.max(jnp.abs(out_bf16_s - ref))) < 0.3

    print("KERNEL_OK")
</pallas_src>

<mosaic_0001>
module attributes {stable_mosaic.version = 11 : i64} {
  func.func @_single_step_kernel(%arg0: i32, %arg1: memref<8x128xf32, #tpu.memory_space<vmem>>, %arg2: memref<3x128x128xf32, #tpu.memory_space<vmem>>, %arg3: memref<3x2x128xf32, #tpu.memory_space<vmem>>, %arg4: memref<8x128xf32, #tpu.memory_space<vmem>>) attributes {dimension_semantics = [#tpu.dimension_semantics<arbitrary>], iteration_bounds = array<i64: 1>, scalar_prefetch = 0 : i64, scratch_operands = 0 : i64, tpu.core_type = #tpu.core_type<tc>, window_params = [{pipeline_mode = #tpu.pipeline_mode<synchronous>, transform_indices = @transform_0, window_bounds = array<i64: 8, 128>}, {pipeline_mode = #tpu.pipeline_mode<synchronous>, transform_indices = @transform_1, window_bounds = array<i64: 3, 128, 128>}, {pipeline_mode = #tpu.pipeline_mode<synchronous>, transform_indices = @transform_2, window_bounds = array<i64: 3, 2, 128>}, {pipeline_mode = #tpu.pipeline_mode<synchronous>, transform_indices = @transform_3, window_bounds = array<i64: 8, 128>}]} {
    %c0 = arith.constant 0 : index
    %c0_0 = arith.constant 0 : index
    %0 = vector.load %arg1[%c0, %c0_0] : memref<8x128xf32, #tpu.memory_space<vmem>>, vector<8x128xf32>
    %c0_1 = arith.constant 0 : index
    %c0_2 = arith.constant 0 : index
    %c0_3 = arith.constant 0 : index
    %1 = vector.load %arg2[%c0_1, %c0_2, %c0_3] : memref<3x128x128xf32, #tpu.memory_space<vmem>>, vector<1x128x128xf32>
    %2 = vector.shape_cast %1 : vector<1x128x128xf32> to vector<128x128xf32>
    %cst = arith.constant dense<0.000000e+00> : vector<8x128xf32>
    %3 = tpu.matmul %0, %2, %cst {dimension_numbers = #tpu.dot_dimension_numbers<[1], [0], [0], [1], [0, 0, 1, 1], [], []>} : vector<8x128xf32>, vector<128x128xf32>, vector<8x128xf32> -> vector<8x128xf32>
    %c0_4 = arith.constant 0 : index
    %c0_5 = arith.constant 0 : index
    %c0_6 = arith.constant 0 : index
    %4 = vector.load %arg3[%c0_4, %c0_5, %c0_6] : memref<3x2x128xf32, #tpu.memory_space<vmem>>, vector<1x1x128xf32>
    %5 = vector.shape_cast %4 : vector<1x1x128xf32> to vector<1x128xf32>
    %c0_7 = arith.constant 0 : index
    %c1 = arith.constant 1 : index
    %c0_8 = arith.constant 0 : index
    %6 = vector.load %arg3[%c0_7, %c1, %c0_8] : memref<3x2x128xf32, #tpu.memory_space<vmem>>, vector<1x1x128xf32>
    %7 = vector.shape_cast %6 : vector<1x1x128xf32> to vector<1x128xf32>
    %cst_9 = arith.constant dense<0.000000e+00> : vector<128xf32>
    %8 = vector.multi_reduction <add>, %3, %cst_9 [0] : vector<8x128xf32> to vector<128xf32>
    %9 = vector.shape_cast %8 : vector<128xf32> to vector<1x128xf32>
    %cst_10 = arith.constant 1.250000e-01 : f32
    %10 = vector.broadcast %cst_10 : f32 to vector<1x128xf32>
    %11 = arith.mulf %9, %10 : vector<1x128xf32>
    %12 = arith.mulf %3, %3 : vector<8x128xf32>
    %cst_11 = arith.constant dense<0.000000e+00> : vector<128xf32>
    %13 = vector.multi_reduction <add>, %12, %cst_11 [0] : vector<8x128xf32> to vector<128xf32>
    %14 = vector.shape_cast %13 : vector<128xf32> to vector<1x128xf32>
    %cst_12 = arith.constant 1.250000e-01 : f32
    %15 = vector.broadcast %cst_12 : f32 to vector<1x128xf32>
    %16 = arith.mulf %14, %15 : vector<1x128xf32>
    %17 = arith.mulf %11, %11 : vector<1x128xf32>
    %18 = arith.subf %16, %17 : vector<1x128xf32>
    %cst_13 = arith.constant 0.000000e+00 : f32
    %19 = vector.broadcast %cst_13 : f32 to vector<1x128xf32>
    %20 = arith.maximumf %18, %19 : vector<1x128xf32>
    %cst_14 = arith.constant 9.99999974E-6 : f32
    %21 = vector.broadcast %cst_14 : f32 to vector<1x128xf32>
    %22 = arith.addf %20, %21 : vector<1x128xf32>
    %23 = math.rsqrt %22 : vector<1x128xf32>
    %24 = arith.mulf %23, %5 : vector<1x128xf32>
    %25 = arith.mulf %11, %24 : vector<1x128xf32>
    %26 = arith.subf %7, %25 : vector<1x128xf32>
    %27 = vector.broadcast %24 : vector<1x128xf32> to vector<8x128xf32>
    %28 = arith.mulf %3, %27 : vector<8x128xf32>
    %29 = vector.broadcast %26 : vector<1x128xf32> to vector<8x128xf32>
    %30 = arith.addf %28, %29 : vector<8x128xf32>
    %cst_15 = arith.constant 0.000000e+00 : f32
    %31 = vector.broadcast %cst_15 : f32 to vector<8x128xf32>
    %32 = arith.maximumf %30, %31 : vector<8x128xf32>
    %c1_16 = arith.constant 1 : index
    %c0_17 = arith.constant 0 : index
    %c0_18 = arith.constant 0 : index
    %33 = vector.load %arg2[%c1_16, %c0_17, %c0_18] : memref<3x128x128xf32, #tpu.memory_space<vmem>>, vector<1x128x128xf32>
    %34 = vector.shape_cast %33 : vector<1x128x128xf32> to vector<128x128xf32>
    %cst_19 = arith.constant dense<0.000000e+00> : vector<8x128xf32>
    %35 = tpu.matmul %32, %34, %cst_19 {dimension_numbers = #tpu.dot_dimension_numbers<[1], [0], [0], [1], [0, 0, 1, 1], [], []>} : vector<8x128xf32>, vector<128x128xf32>, vector<8x128xf32> -> vector<8x128xf32>
    %c1_20 = arith.constant 1 : index
    %c0_21 = arith.constant 0 : index
    %c0_22 = arith.constant 0 : index
    %36 = vector.load %arg3[%c1_20, %c0_21, %c0_22] : memref<3x2x128xf32, #tpu.memory_space<vmem>>, vector<1x1x128xf32>
    %37 = vector.shape_cast %36 : vector<1x1x128xf32> to vector<1x128xf32>
    %c1_23 = arith.constant 1 : index
    %c1_24 = arith.constant 1 : index
    %c0_25 = arith.constant 0 : index
    %38 = vector.load %arg3[%c1_23, %c1_24, %c0_25] : memref<3x2x128xf32, #tpu.memory_space<vmem>>, vector<1x1x128xf32>
    %39 = vector.shape_cast %38 : vector<1x1x128xf32> to vector<1x128xf32>
    %cst_26 = arith.constant dense<0.000000e+00> : vector<128xf32>
    %40 = vector.multi_reduction <add>, %35, %cst_26 [0] : vector<8x128xf32> to vector<128xf32>
    %41 = vector.shape_cast %40 : vector<128xf32> to vector<1x128xf32>
    %cst_27 = arith.constant 1.250000e-01 : f32
    %42 = vector.broadcast %cst_27 : f32 to vector<1x128xf32>
    %43 = arith.mulf %41, %42 : vector<1x128xf32>
    %44 = arith.mulf %35, %35 : vector<8x128xf32>
    %cst_28 = arith.constant dense<0.000000e+00> : vector<128xf32>
    %45 = vector.multi_reduction <add>, %44, %cst_28 [0] : vector<8x128xf32> to vector<128xf32>
    %46 = vector.shape_cast %45 : vector<128xf32> to vector<1x128xf32>
    %cst_29 = arith.constant 1.250000e-01 : f32
    %47 = vector.broadcast %cst_29 : f32 to vector<1x128xf32>
    %48 = arith.mulf %46, %47 : vector<1x128xf32>
    %49 = arith.mulf %43, %43 : vector<1x128xf32>
    %50 = arith.subf %48, %49 : vector<1x128xf32>
    %cst_30 = arith.constant 0.000000e+00 : f32
    %51 = vector.broadcast %cst_30 : f32 to vector<1x128xf32>
    %52 = arith.maximumf %50, %51 : vector<1x128xf32>
    %cst_31 = arith.constant 9.99999974E-6 : f32
    %53 = vector.broadcast %cst_31 : f32 to vector<1x128xf32>
    %54 = arith.addf %52, %53 : vector<1x128xf32>
    %55 = math.rsqrt %54 : vector<1x128xf32>
    %56 = arith.mulf %55, %37 : vector<1x128xf32>
    %57 = arith.mulf %43, %56 : vector<1x128xf32>
    %58 = arith.subf %39, %57 : vector<1x128xf32>
    %59 = vector.broadcast %56 : vector<1x128xf32> to vector<8x128xf32>
    %60 = arith.mulf %35, %59 : vector<8x128xf32>
    %61 = vector.broadcast %58 : vector<1x128xf32> to vector<8x128xf32>
    %62 = arith.addf %60, %61 : vector<8x128xf32>
    %cst_32 = arith.constant 0.000000e+00 : f32
    %63 = vector.broadcast %cst_32 : f32 to vector<8x128xf32>
    %64 = arith.maximumf %62, %63 : vector<8x128xf32>
    %c2 = arith.constant 2 : index
    %c0_33 = arith.constant 0 : index
    %c0_34 = arith.constant 0 : index
    %65 = vector.load %arg2[%c2, %c0_33, %c0_34] : memref<3x128x128xf32, #tpu.memory_space<vmem>>, vector<1x128x128xf32>
    %66 = vector.shape_cast %65 : vector<1x128x128xf32> to vector<128x128xf32>
    %cst_35 = arith.constant dense<0.000000e+00> : vector<8x128xf32>
    %67 = tpu.matmul %64, %66, %cst_35 {dimension_numbers = #tpu.dot_dimension_numbers<[1], [0], [0], [1], [0, 0, 1, 1], [], []>} : vector<8x128xf32>, vector<128x128xf32>, vector<8x128xf32> -> vector<8x128xf32>
    %c2_36 = arith.constant 2 : index
    %c0_37 = arith.constant 0 : index
    %c0_38 = arith.constant 0 : index
    %68 = vector.load %arg3[%c2_36, %c0_37, %c0_38] : memref<3x2x128xf32, #tpu.memory_space<vmem>>, vector<1x1x128xf32>
    %69 = vector.shape_cast %68 : vector<1x1x128xf32> to vector<1x128xf32>
    %c2_39 = arith.constant 2 : index
    %c1_40 = arith.constant 1 : index
    %c0_41 = arith.constant 0 : index
    %70 = vector.load %arg3[%c2_39, %c1_40, %c0_41] : memref<3x2x128xf32, #tpu.memory_space<vmem>>, vector<1x1x128xf32>
    %71 = vector.shape_cast %70 : vector<1x1x128xf32> to vector<1x128xf32>
    %cst_42 = arith.constant dense<0.000000e+00> : vector<128xf32>
    %72 = vector.multi_reduction <add>, %67, %cst_42 [0] : vector<8x128xf32> to vector<128xf32>
    %73 = vector.shape_cast %72 : vector<128xf32> to vector<1x128xf32>
    %cst_43 = arith.constant 1.250000e-01 : f32
    %74 = vector.broadcast %cst_43 : f32 to vector<1x128xf32>
    %75 = arith.mulf %73, %74 : vector<1x128xf32>
    %76 = arith.mulf %67, %67 : vector<8x128xf32>
    %cst_44 = arith.constant dense<0.000000e+00> : vector<128xf32>
    %77 = vector.multi_reduction <add>, %76, %cst_44 [0] : vector<8x128xf32> to vector<128xf32>
    %78 = vector.shape_cast %77 : vector<128xf32> to vector<1x128xf32>
    %cst_45 = arith.constant 1.250000e-01 : f32
    %79 = vector.broadcast %cst_45 : f32 to vector<1x128xf32>
    %80 = arith.mulf %78, %79 : vector<1x128xf32>
    %81 = arith.mulf %75, %75 : vector<1x128xf32>
    %82 = arith.subf %80, %81 : vector<1x128xf32>
    %cst_46 = arith.constant 0.000000e+00 : f32
    %83 = vector.broadcast %cst_46 : f32 to vector<1x128xf32>
    %84 = arith.maximumf %82, %83 : vector<1x128xf32>
    %cst_47 = arith.constant 9.99999974E-6 : f32
    %85 = vector.broadcast %cst_47 : f32 to vector<1x128xf32>
    %86 = arith.addf %84, %85 : vector<1x128xf32>
    %87 = math.rsqrt %86 : vector<1x128xf32>
    %88 = arith.mulf %87, %69 : vector<1x128xf32>
    %89 = arith.mulf %75, %88 : vector<1x128xf32>
    %90 = arith.subf %71, %89 : vector<1x128xf32>
    %91 = vector.broadcast %88 : vector<1x128xf32> to vector<8x128xf32>
    %92 = arith.mulf %67, %91 : vector<8x128xf32>
    %93 = vector.broadcast %90 : vector<1x128xf32> to vector<8x128xf32>
    %94 = arith.addf %92, %93 : vector<8x128xf32>
    %cst_48 = arith.constant 0.000000e+00 : f32
    %95 = vector.broadcast %cst_48 : f32 to vector<8x128xf32>
    %96 = arith.maximumf %94, %95 : vector<8x128xf32>
    %c0_49 = arith.constant 0 : index
    %c0_50 = arith.constant 0 : index
    %97 = vector.load %arg4[%c0_49, %c0_50] : memref<8x128xf32, #tpu.memory_space<vmem>>, vector<8x128xf32>
    tpu.vector_store %arg4[%c0_49, %c0_50], %96 {strides = array<i32>} : memref<8x128xf32, #tpu.memory_space<vmem>>, vector<8x128xf32>,
    return
  }
  func.func @transform_0(%arg0: i32) -> (i32, i32) {
    %c0_i32 = arith.constant 0 : i32
    %c0_i32_0 = arith.constant 0 : i32
    %c0_i32_1 = arith.constant 0 : i32
    return %c0_i32, %c0_i32_0 : i32, i32
  }
  func.func @transform_1(%arg0: i32) -> (i32, i32, i32) {
    %c0_i32 = arith.constant 0 : i32
    %c0_i32_0 = arith.constant 0 : i32
    %c0_i32_1 = arith.constant 0 : i32
    %c0_i32_2 = arith.constant 0 : i32
    return %c0_i32, %c0_i32_0, %c0_i32_1 : i32, i32, i32
  }
  func.func @transform_2(%arg0: i32) -> (i32, i32, i32) {
    %c0_i32 = arith.constant 0 : i32
    %c0_i32_0 = arith.constant 0 : i32
    %c0_i32_1 = arith.constant 0 : i32
    %c0_i32_2 = arith.constant 0 : i32
    return %c0_i32, %c0_i32_0, %c0_i32_1 : i32, i32, i32
  }
  func.func @transform_3(%arg0: i32) -> (i32, i32) {
    %c0_i32 = arith.constant 0 : i32
    %c0_i32_0 = arith.constant 0 : i32
    %c0_i32_1 = arith.constant 0 : i32
    return %c0_i32, %c0_i32_0 : i32, i32
  }
}

</mosaic_0001>

<llo_original>
// kernel: tpu_custom_call.1
$region0: #{tpu_custom_call.1}
  #allocation0 [shape = 'u32[]', space=smem, size = 0x4, offset = 0x4, fixed_abs, tag = 'smem constant byte address 0x4 - core index']
  #allocation1 [shape = 'u32[144,128]{1,0:T(1,128)}', space=vmem, size = 0x12000, scoped, tag = 'internal scratch']
  %s0 = inlined_call_operand.hbm [shape: f32[8,128], index: 0, kind: input, shape index: {}]
  %s1 = inlined_call_operand.hbm [shape: f32[3,128,128], index: 1, kind: input, shape index: {}]
  %s2 = inlined_call_operand.vmem [shape: f32[3,2,128], index: 2, kind: input, shape index: {}]
  %s3 = inlined_call_operand.hbm [shape: f32[8,128], index: 3, kind: output, shape index: {}]
  %s4 = sld [smem:[#allocation0]]
  $region30: #{tpu_custom_call.1} parent=0
    _
  %s6 = ssub.s32 1, %s4
  %s7 = scalar_select 0, %s6, %s4
  $region1: #{tpu_custom_call.1} parent=0
    #allocation2 [shape = 'u8[4096]{0}', space=vmem, size = 0x1000, scoped, tag = 'input window, operand 0, single buffered']
    #allocation3 [shape = 's32[1]{0}', space=sflag, size = 0x4, scoped, tag = 'scoped memory for tpu_custom_call.1']
    #allocation4 [shape = 's32[1]{0}', space=sflag, size = 0x4, scoped, tag = 'scoped memory for tpu_custom_call.1']
    #allocation5 [shape = 'u8[196608]{0}', space=vmem, size = 0x30000, scoped, tag = 'input window, operand 1, single buffered']
    #allocation6 [shape = 's32[1]{0}', space=sflag, size = 0x4, scoped, tag = 'scoped memory for tpu_custom_call.1']
    #allocation7 [shape = 'u8[4096]{0}', space=vmem, size = 0x1000, scoped, tag = 'output window, operand 0, single buffered']
    %8 = vsyncpa [#allocation3], 0
    %9 = vsyncpa [#allocation6], 0
    %10 = vsyncpa [#allocation4], 0
    // Predicated region
    $region2: #{tpu_custom_call.1} parent=1 // pred_check
      _
    $region3: #{tpu_custom_call.1} parent=1 // pred_check_branch
      %12 = sbr.rel (0) target = $region5
    $region4: #{tpu_custom_call.1} parent=1 // pred_region
      %s14 = ssub.s32 128, 128
      %15 = vsyncadd [#allocation3], %s14
      %s17 = sshll.u32 [#allocation2], 4
      %s18 = int_to_ptr.vmem [resolvable:$true] %s17
      %20 = dma.hbm_to_vmem [thread:$0]  %s0, 128, %s18, [#allocation3]
    $region5: #{tpu_custom_call.1} parent=1 // pred_fallthru
      _
    // Predicated region
    $region6: #{tpu_custom_call.1} parent=1 // pred_check
      _
    $region7: #{tpu_custom_call.1} parent=1 // pred_check_branch
      %22 = sbr.rel (0) target = $region9
    $region8: #{tpu_custom_call.1} parent=1 // pred_region
      %s24 = ssub.s32 6144, 6144
      %25 = vsyncadd [#allocation6], %s24
      %s26 = sshll.u32 [#allocation5], 4
      %s27 = int_to_ptr.vmem [resolvable:$true] %s26
      %32 = dma.hbm_to_vmem [thread:$0]  %s1, 6144, %s27, [#allocation6], 128, 128, 8
    $region9: #{tpu_custom_call.1} parent=1 // pred_fallthru
      _
    // Predicated region
    $region10: #{tpu_custom_call.1} parent=1 // pred_check
      _
    $region11: #{tpu_custom_call.1} parent=1 // pred_check_branch
      %34 = sbr.rel (0) target = $region13
    $region12: #{tpu_custom_call.1} parent=1 // pred_region
      _
    $region13: #{tpu_custom_call.1} parent=1 // pred_fallthru
      _
    // Predicated region
    $region14: #{tpu_custom_call.1} parent=1 // pred_check
      _
    $region15: #{tpu_custom_call.1} parent=1 // pred_check_branch
      %36 = sbr.rel (0) target = $region17
    $region16: #{tpu_custom_call.1} parent=1 // pred_region
      %37 = dma.done [#allocation3], 128
    $region17: #{tpu_custom_call.1} parent=1 // pred_fallthru
      _
    // Predicated region
    $region18: #{tpu_custom_call.1} parent=1 // pred_check
      _
    $region19: #{tpu_custom_call.1} parent=1 // pred_check_branch
      %39 = sbr.rel (0) target = $region21
    $region20: #{tpu_custom_call.1} parent=1 // pred_region
      %40 = dma.done [#allocation6], 6144
    $region21: #{tpu_custom_call.1} parent=1 // pred_fallthru
      _
    %v41 = vld [vmem:[#allocation2] sm:$0xff]
    %v42 = vld [vmem:[#allocation5] sm:$0xff]
    %v43 = vld [vmem:[#allocation5 + $0x8] sm:$0xff]
    %v44 = vld [vmem:[#allocation5 + $0x10] sm:$0xff]
    %v45 = vld [vmem:[#allocation5 + $0x18] sm:$0xff]
    %v46 = vld [vmem:[#allocation5 + $0x20] sm:$0xff]
    %v47 = vld [vmem:[#allocation5 + $0x28] sm:$0xff]
    %v48 = vld [vmem:[#allocation5 + $0x30] sm:$0xff]
    %v49 = vld [vmem:[#allocation5 + $0x38] sm:$0xff]
    %v50 = vld [vmem:[#allocation5 + $0x40] sm:$0xff]
    %v51 = vld [vmem:[#allocation5 + $0x48] sm:$0xff]
    %v52 = vld [vmem:[#allocation5 + $0x50] sm:$0xff]
    %v53 = vld [vmem:[#allocation5 + $0x58] sm:$0xff]
    %v54 = vld [vmem:[#allocation5 + $0x60] sm:$0xff]
    %v55 = vld [vmem:[#allocation5 + $0x68] sm:$0xff]
    %v56 = vld [vmem:[#allocation5 + $0x70] sm:$0xff]
    %v57 = vld [vmem:[#allocation5 + $0x78] sm:$0xff]
    %58 = vmatprep.subr.mxu0 0.0
    %59 = vmatpush1.msra.mxu0 %v42
    %60 = vmatprep.subr.mxu0 0.0
    %61 = vmatpush1.msra.mxu0 %v43
    %62 = vmatprep.subr.mxu0 0.0
    %63 = vmatpush1.msra.mxu0 %v44
    %64 = vmatprep.subr.mxu0 0.0
    %65 = vmatpush1.msra.mxu0 %v45
    %66 = vmatprep.subr.mxu0 0.0
    %67 = vmatpush1.msra.mxu0 %v46
    %68 = vmatprep.subr.mxu0 0.0
    %69 = vmatpush1.msra.mxu0 %v47
    %70 = vmatprep.subr.mxu0 0.0
    %71 = vmatpush1.msra.mxu0 %v48
    %72 = vmatprep.subr.mxu0 0.0
    %73 = vmatpush1.msra.mxu0 %v49
    %74 = vmatprep.subr.mxu0 0.0
    %75 = vmatpush1.msra.mxu0 %v50
    %76 = vmatprep.subr.mxu0 0.0
    %77 = vmatpush1.msra.mxu0 %v51
    %78 = vmatprep.subr.mxu0 0.0
    %79 = vmatpush1.msra.mxu0 %v52
    %80 = vmatprep.subr.mxu0 0.0
    %81 = vmatpush1.msra.mxu0 %v53
    %82 = vmatprep.subr.mxu0 0.0
    %83 = vmatpush1.msra.mxu0 %v54
    %84 = vmatprep.subr.mxu0 0.0
    %85 = vmatpush1.msra.mxu0 %v55
    %86 = vmatprep.subr.mxu0 0.0
    %87 = vmatpush1.msra.mxu0 %v56
    %88 = vmatprep.subr.mxu0 0.0
    %89 = vmatpush1.msra.mxu0 %v57
    %90 = vmatprep.subr.mxu0 0.0
    %91 = vmatpush1.msra.mxu0 0.0
    %92 = vmatprep.subr.mxu0 0.0
    %93 = vmatpush1.msra.mxu0 0.0
    %94 = vmatprep.subr.mxu0 0.0
    %95 = vmatpush1.msra.mxu0 0.0
    %96 = vmatprep.subr.mxu0 0.0
    %97 = vmatpush1.msra.mxu0 0.0
    %98 = vmatprep.subr.mxu0 0.0
    %99 = vmatpush1.msra.mxu0 0.0
    %100 = vmatprep.subr.mxu0 0.0
    %101 = vmatpush1.msra.mxu0 0.0
    %102 = vmatprep.subr.mxu0 0.0
    %103 = vmatpush1.msra.mxu0 0.0
    %104 = vmatprep.subr.mxu0 0.0
    %105 = vmatpush1.msra.mxu0 0.0
    %106 = vmatprep.subr.mxu0 0.0
    %107 = vmatpush1.msra.mxu0 0.0
    %108 = vmatprep.subr.mxu0 0.0
    %109 = vmatpush1.msra.mxu0 0.0
    %110 = vmatprep.subr.mxu0 0.0
    %111 = vmatpush1.msra.mxu0 0.0
    %112 = vmatprep.subr.mxu0 0.0
    %113 = vmatpush1.msra.mxu0 0.0
    %114 = vmatprep.subr.mxu0 0.0
    %115 = vmatpush1.msra.mxu0 0.0
    %116 = vmatprep.subr.mxu0 0.0
    %117 = vmatpush1.msra.mxu0 0.0
    %118 = vmatprep.subr.mxu0 0.0
    %119 = vmatpush1.msra.mxu0 0.0
    %120 = vmatprep.subr.mxu0 0.0
    %121 = vmatpush1.msra.mxu0 0.0
    %122 = vmatprep.mubr.f32.mxu0 0.0
    %123 = vmatmul.mubr.f32.gmra.mrb[0].mxu0 %v41
    %v124 = vpop.f32.mrb[0].mxu0
    %v125 = vadd.f32 0.0, %v124
    %v126 = vpop.f32.mrb[0].mxu0
    %127 = vdwg.mxu0
    %v128 = vld [vmem:[%s2] sm:$0x1]
    %v129 = vld [vmem:[%s2 + $0x1] sm:$0x1]
    %v130 = vrot.slane %v125, 4
    %v131 = vadd.f32 %v125, %v130
    %v132 = vrot.slane %v131, 2
    %v133 = vadd.f32 %v131, %v132
    %v134 = vrot.slane %v133, 1
    %v135 = vadd.f32 %v133, %v134
    %v136 = vmul.f32 %v135, 0.125
    %v137 = vmul.f32 %v125, %v125
    %v138 = vrot.slane %v137, 4
    %v139 = vadd.f32 %v137, %v138
    %v140 = vrot.slane %v139, 2
    %v141 = vadd.f32 %v139, %v140
    %v142 = vrot.slane %v141, 1
    %v143 = vadd.f32 %v141, %v142
    %v144 = vmul.f32 %v143, 0.125
    %v145 = vmul.f32 %v136, %v136
    %v146 = vsub.f32 %v144, %v145
    %v147 = vmax.f32 %v146, 0.0
    %v148 = vadd.f32 %v147, 1e-05
    %v149 = vrsqrt.pop %v148
    %v150 = vmul.f32 %v149, %v128
    %v151 = vmul.f32 %v136, %v150
    %v152 = vsub.f32 %v129, %v151
    %v153 = vlaneseq
    %v154 = vshrl.u32 %v153, 7
    %v155 = vsub.s32 0, %v154
    %v156 = vrot.slane %v150, %v155
    %v157 = vmul.f32 %v125, %v156
    %v158 = vlaneseq
    %v159 = vshrl.u32 %v158, 7
    %v160 = vsub.s32 0, %v159
    %v161 = vrot.slane %v152, %v160
    %v162 = vadd.f32 %v157, %v161
    %v163 = vmax.f32 %v162, 0.0
    %s164 = scalar_lea.vmem [#allocation5], 128
    %v165 = vld [vmem:[%s164] sm:$0xff]
    %v166 = vld [vmem:[%s164 + $0x8] sm:$0xff]
    %v167 = vld [vmem:[%s164 + $0x10] sm:$0xff]
    %v168 = vld [vmem:[%s164 + $0x18] sm:$0xff]
    %v169 = vld [vmem:[%s164 + $0x20] sm:$0xff]
    %v170 = vld [vmem:[%s164 + $0x28] sm:$0xff]
    %v171 = vld [vmem:[%s164 + $0x30] sm:$0xff]
    %v172 = vld [vmem:[%s164 + $0x38] sm:$0xff]
    %v173 = vld [vmem:[%s164 + $0x40] sm:$0xff]
    %v174 = vld [vmem:[%s164 + $0x48] sm:$0xff]
    %v175 = vld [vmem:[%s164 + $0x50] sm:$0xff]
    %v176 = vld [vmem:[%s164 + $0x58] sm:$0xff]
    %v177 = vld [vmem:[%s164 + $0x60] sm:$0xff]
    %v178 = vld [vmem:[%s164 + $0x68] sm:$0xff]
    %v179 = vld [vmem:[%s164 + $0x70] sm:$0xff]
    %v180 = vld [vmem:[%s164 + $0x78] sm:$0xff]
    %181 = vmatprep.subr.mxu0 0.0
    %182 = vmatpush1.msra.mxu0 %v165
    %183 = vmatprep.subr.mxu0 0.0
    %184 = vmatpush1.msra.mxu0 %v166
    %185 = vmatprep.subr.mxu0 0.0
    %186 = vmatpush1.msra.mxu0 %v167
    %187 = vmatprep.subr.mxu0 0.0
    %188 = vmatpush1.msra.mxu0 %v168
    %189 = vmatprep.subr.mxu0 0.0
    %190 = vmatpush1.msra.mxu0 %v169
    %191 = vmatprep.subr.mxu0 0.0
    %192 = vmatpush1.msra.mxu0 %v170
    %193 = vmatprep.subr.mxu0 0.0
    %194 = vmatpush1.msra.mxu0 %v171
    %195 = vmatprep.subr.mxu0 0.0
    %196 = vmatpush1.msra.mxu0 %v172
    %197 = vmatprep.subr.mxu0 0.0
    %198 = vmatpush1.msra.mxu0 %v173
    %199 = vmatprep.subr.mxu0 0.0
    %200 = vmatpush1.msra.mxu0 %v174
    %201 = vmatprep.subr.mxu0 0.0
    %202 = vmatpush1.msra.mxu0 %v175
    %203 = vmatprep.subr.mxu0 0.0
    %204 = vmatpush1.msra.mxu0 %v176
    %205 = vmatprep.subr.mxu0 0.0
    %206 = vmatpush1.msra.mxu0 %v177
    %207 = vmatprep.subr.mxu0 0.0
    %208 = vmatpush1.msra.mxu0 %v178
    %209 = vmatprep.subr.mxu0 0.0
    %210 = vmatpush1.msra.mxu0 %v179
    %211 = vmatprep.subr.mxu0 0.0
    %212 = vmatpush1.msra.mxu0 %v180
    %213 = vmatprep.subr.mxu0 0.0
    %214 = vmatpush1.msra.mxu0 0.0
    %215 = vmatprep.subr.mxu0 0.0
    %216 = vmatpush1.msra.mxu0 0.0
    %217 = vmatprep.subr.mxu0 0.0
    %218 = vmatpush1.msra.mxu0 0.0
    %219 = vmatprep.subr.mxu0 0.0
    %220 = vmatpush1.msra.mxu0 0.0
    %221 = vmatprep.subr.mxu0 0.0
    %222 = vmatpush1.msra.mxu0 0.0
    %223 = vmatprep.subr.mxu0 0.0
    %224 = vmatpush1.msra.mxu0 0.0
    %225 = vmatprep.subr.mxu0 0.0
    %226 = vmatpush1.msra.mxu0 0.0
    %227 = vmatprep.subr.mxu0 0.0
    %228 = vmatpush1.msra.mxu0 0.0
    %229 = vmatprep.subr.mxu0 0.0
    %230 = vmatpush1.msra.mxu0 0.0
    %231 = vmatprep.subr.mxu0 0.0
    %232 = vmatpush1.msra.mxu0 0.0
    %233 = vmatprep.subr.mxu0 0.0
    %234 = vmatpush1.msra.mxu0 0.0
    %235 = vmatprep.subr.mxu0 0.0
    %236 = vmatpush1.msra.mxu0 0.0
    %237 = vmatprep.subr.mxu0 0.0
    %238 = vmatpush1.msra.mxu0 0.0
    %239 = vmatprep.subr.mxu0 0.0
    %240 = vmatpush1.msra.mxu0 0.0
    %241 = vmatprep.subr.mxu0 0.0
    %242 = vmatpush1.msra.mxu0 0.0
    %243 = vmatprep.subr.mxu0 0.0
    %244 = vmatpush1.msra.mxu0 0.0
    %245 = vmatprep.mubr.f32.mxu0 0.0
    %246 = vmatmul.mubr.f32.gmra.mrb[0].mxu0 %v163
    %v247 = vpop.f32.mrb[0].mxu0
    %v248 = vadd.f32 0.0, %v247
    %v249 = vpop.f32.mrb[0].mxu0
    %250 = vdwg.mxu0
    %s251 = scalar_lea.vmem %s2, 2
    %v252 = vld [vmem:[%s251] sm:$0x1]
    %v253 = vld [vmem:[%s251 + $0x1] sm:$0x1]
    %v254 = vrot.slane %v248, 4
    %v255 = vadd.f32 %v248, %v254
    %v256 = vrot.slane %v255, 2
    %v257 = vadd.f32 %v255, %v256
    %v258 = vrot.slane %v257, 1
    %v259 = vadd.f32 %v257, %v258
    %v260 = vmul.f32 %v259, 0.125
    %v261 = vmul.f32 %v248, %v248
    %v262 = vrot.slane %v261, 4
    %v263 = vadd.f32 %v261, %v262
    %v264 = vrot.slane %v263, 2
    %v265 = vadd.f32 %v263, %v264
    %v266 = vrot.slane %v265, 1
    %v267 = vadd.f32 %v265, %v266
    %v268 = vmul.f32 %v267, 0.125
    %v269 = vmul.f32 %v260, %v260
    %v270 = vsub.f32 %v268, %v269
    %v271 = vmax.f32 %v270, 0.0
    %v272 = vadd.f32 %v271, 1e-05
    %v273 = vrsqrt.pop %v272
    %v274 = vmul.f32 %v273, %v252
    %v275 = vmul.f32 %v260, %v274
    %v276 = vsub.f32 %v253, %v275
    %v277 = vlaneseq
    %v278 = vshrl.u32 %v277, 7
    %v279 = vsub.s32 0, %v278
    %v280 = vrot.slane %v274, %v279
    %v281 = vmul.f32 %v248, %v280
    %v282 = vlaneseq
    %v283 = vshrl.u32 %v282, 7
    %v284 = vsub.s32 0, %v283
    %v285 = vrot.slane %v276, %v284
    %v286 = vadd.f32 %v281, %v285
    %v287 = vmax.f32 %v286, 0.0
    %s288 = scalar_lea.vmem [#allocation5], 256
    %v289 = vld [vmem:[%s288] sm:$0xff]
    %v290 = vld [vmem:[%s288 + $0x8] sm:$0xff]
    %v291 = vld [vmem:[%s288 + $0x10] sm:$0xff]
    %v292 = vld [vmem:[%s288 + $0x18] sm:$0xff]
    %v293 = vld [vmem:[%s288 + $0x20] sm:$0xff]
    %v294 = vld [vmem:[%s288 + $0x28] sm:$0xff]
    %v295 = vld [vmem:[%s288 + $0x30] sm:$0xff]
    %v296 = vld [vmem:[%s288 + $0x38] sm:$0xff]
    %v297 = vld [vmem:[%s288 + $0x40] sm:$0xff]
    %v298 = vld [vmem:[%s288 + $0x48] sm:$0xff]
    %v299 = vld [vmem:[%s288 + $0x50] sm:$0xff]
    %v300 = vld [vmem:[%s288 + $0x58] sm:$0xff]
    %v301 = vld [vmem:[%s288 + $0x60] sm:$0xff]
    %v302 = vld [vmem:[%s288 + $0x68] sm:$0xff]
    %v303 = vld [vmem:[%s288 + $0x70] sm:$0xff]
    %v304 = vld [vmem:[%s288 + $0x78] sm:$0xff]
    %305 = vmatprep.subr.mxu0 0.0
    %306 = vmatpush1.msra.mxu0 %v289
    %307 = vmatprep.subr.mxu0 0.0
    %308 = vmatpush1.msra.mxu0 %v290
    %309 = vmatprep.subr.mxu0 0.0
    %310 = vmatpush1.msra.mxu0 %v291
    %311 = vmatprep.subr.mxu0 0.0
    %312 = vmatpush1.msra.mxu0 %v292
    %313 = vmatprep.subr.mxu0 0.0
    %314 = vmatpush1.msra.mxu0 %v293
    %315 = vmatprep.subr.mxu0 0.0
    %316 = vmatpush1.msra.mxu0 %v294
    %317 = vmatprep.subr.mxu0 0.0
    %318 = vmatpush1.msra.mxu0 %v295
    %319 = vmatprep.subr.mxu0 0.0
    %320 = vmatpush1.msra.mxu0 %v296
    %321 = vmatprep.subr.mxu0 0.0
    %322 = vmatpush1.msra.mxu0 %v297
    %323 = vmatprep.subr.mxu0 0.0
    %324 = vmatpush1.msra.mxu0 %v298
    %325 = vmatprep.subr.mxu0 0.0
    %326 = vmatpush1.msra.mxu0 %v299
    %327 = vmatprep.subr.mxu0 0.0
    %328 = vmatpush1.msra.mxu0 %v300
    %329 = vmatprep.subr.mxu0 0.0
    %330 = vmatpush1.msra.mxu0 %v301
    %331 = vmatprep.subr.mxu0 0.0
    %332 = vmatpush1.msra.mxu0 %v302
    %333 = vmatprep.subr.mxu0 0.0
    %334 = vmatpush1.msra.mxu0 %v303
    %335 = vmatprep.subr.mxu0 0.0
    %336 = vmatpush1.msra.mxu0 %v304
    %337 = vmatprep.subr.mxu0 0.0
    %338 = vmatpush1.msra.mxu0 0.0
    %339 = vmatprep.subr.mxu0 0.0
    %340 = vmatpush1.msra.mxu0 0.0
    %341 = vmatprep.subr.mxu0 0.0
    %342 = vmatpush1.msra.mxu0 0.0
    %343 = vmatprep.subr.mxu0 0.0
    %344 = vmatpush1.msra.mxu0 0.0
    %345 = vmatprep.subr.mxu0 0.0
    %346 = vmatpush1.msra.mxu0 0.0
    %347 = vmatprep.subr.mxu0 0.0
    %348 = vmatpush1.msra.mxu0 0.0
    %349 = vmatprep.subr.mxu0 0.0
    %350 = vmatpush1.msra.mxu0 0.0
    %351 = vmatprep.subr.mxu0 0.0
    %352 = vmatpush1.msra.mxu0 0.0
    %353 = vmatprep.subr.mxu0 0.0
    %354 = vmatpush1.msra.mxu0 0.0
    %355 = vmatprep.subr.mxu0 0.0
    %356 = vmatpush1.msra.mxu0 0.0
    %357 = vmatprep.subr.mxu0 0.0
    %358 = vmatpush1.msra.mxu0 0.0
    %359 = vmatprep.subr.mxu0 0.0
    %360 = vmatpush1.msra.mxu0 0.0
    %361 = vmatprep.subr.mxu0 0.0
    %362 = vmatpush1.msra.mxu0 0.0
    %363 = vmatprep.subr.mxu0 0.0
    %364 = vmatpush1.msra.mxu0 0.0
    %365 = vmatprep.subr.mxu0 0.0
    %366 = vmatpush1.msra.mxu0 0.0
    %367 = vmatprep.subr.mxu0 0.0
    %368 = vmatpush1.msra.mxu0 0.0
    %369 = vmatprep.mubr.f32.mxu0 0.0
    %370 = vmatmul.mubr.f32.gmra.mrb[0].mxu0 %v287
    %v371 = vpop.f32.mrb[0].mxu0
    %v372 = vadd.f32 0.0, %v371
    %v373 = vpop.f32.mrb[0].mxu0
    %374 = vdwg.mxu0
    %s375 = scalar_lea.vmem %s2, 4
    %v376 = vld [vmem:[%s375] sm:$0x1]
    %v377 = vld [vmem:[%s375 + $0x1] sm:$0x1]
    %v378 = vrot.slane %v372, 4
    %v379 = vadd.f32 %v372, %v378
    %v380 = vrot.slane %v379, 2
    %v381 = vadd.f32 %v379, %v380
    %v382 = vrot.slane %v381, 1
    %v383 = vadd.f32 %v381, %v382
    %v384 = vmul.f32 %v383, 0.125
    %v385 = vmul.f32 %v372, %v372
    %v386 = vrot.slane %v385, 4
    %v387 = vadd.f32 %v385, %v386
    %v388 = vrot.slane %v387, 2
    %v389 = vadd.f32 %v387, %v388
    %v390 = vrot.slane %v389, 1
    %v391 = vadd.f32 %v389, %v390
    %v392 = vmul.f32 %v391, 0.125
    %v393 = vmul.f32 %v384, %v384
    %v394 = vsub.f32 %v392, %v393
    %v395 = vmax.f32 %v394, 0.0
    %v396 = vadd.f32 %v395, 1e-05
    %v397 = vrsqrt.pop %v396
    %v398 = vmul.f32 %v397, %v376
    %v399 = vmul.f32 %v384, %v398
    %v400 = vsub.f32 %v377, %v399
    %v401 = vlaneseq
    %v402 = vshrl.u32 %v401, 7
    %v403 = vsub.s32 0, %v402
    %v404 = vrot.slane %v398, %v403
    %v405 = vmul.f32 %v372, %v404
    %v406 = vlaneseq
    %v407 = vshrl.u32 %v406, 7
    %v408 = vsub.s32 0, %v407
    %v409 = vrot.slane %v400, %v408
    %v410 = vadd.f32 %v405, %v409
    %v411 = vmax.f32 %v410, 0.0
    %412 = vst [vmem:[#allocation7] sm:$0xff] %v411
    // Predicated region
    $region22: #{tpu_custom_call.1} parent=1 // pred_check
      _
    $region23: #{tpu_custom_call.1} parent=1 // pred_check_branch
      %414 = sbr.rel (0) target = $region25
    $region24: #{tpu_custom_call.1} parent=1 // pred_region
      %s416 = ssub.s32 128, 128
      %417 = vsyncadd [#allocation4], %s416
      %s419 = sshll.u32 [#allocation7], 4
      %s420 = int_to_ptr.vmem [resolvable:$true] %s419
      %422 = dma.vmem_to_hbm [thread:$0]  %s420, 128, %s3, [#allocation4]
    $region25: #{tpu_custom_call.1} parent=1 // pred_fallthru
      _
    // Predicated region
    $region26: #{tpu_custom_call.1} parent=1 // pred_check
      _
    $region27: #{tpu_custom_call.1} parent=1 // pred_check_branch
      %424 = sbr.rel (0) target = $region29
    $region28: #{tpu_custom_call.1} parent=1 // pred_region
      %425 = dma.done [#allocation4], 128
    $region29: #{tpu_custom_call.1} parent=1 // pred_fallthru
      _
    %426 = vsyncpa [#allocation3], 1
    %427 = vsyncpa [#allocation6], 1
    %428 = vsyncpa [#allocation4], 1

</llo_original>
